<compile_context>
chip_gen: v5e
topology: v5e:2x2
jax: 0.10.0
libtpu: 0.0.40
codegen_flags: <defaults>
</compile_context>

<pallas_src>
import jax
import jax.numpy as jnp
from jax.experimental import pallas as pl
from jax.experimental.pallas import tpu as pltpu

EPS = 1e-8


# ---------------------------------------------------------------------------
# Kernel: fused per-row (last-axis) mean-center + range-scale.
# ---------------------------------------------------------------------------
def normalize_audio_kernel(x_ref, o_ref):
    x = x_ref[...]                                        # [rows, samples]
    x_max = jnp.max(x, axis=-1, keepdims=True)            # XLU reductions
    x_min = jnp.min(x, axis=-1, keepdims=True)
    x_mean = jnp.mean(x, axis=-1, keepdims=True)
    val_range = (x_max - x_min + EPS) * 0.5
    o_ref[...] = (x - x_mean) / val_range                 # VPU/EUP epilogue


# ---------------------------------------------------------------------------
# Wrapper: single jit, single pallas_call, whole-array VMEM blocks.
# ---------------------------------------------------------------------------
@jax.jit
def normalize_audio(x):
    orig_shape = x.shape
    samples = orig_shape[-1]
    rows = 1
    for d in orig_shape[:-1]:
        rows *= d
    x2 = x.reshape(rows, samples)

    itemsize = jnp.dtype(x.dtype).itemsize
    cost = pl.CostEstimate(
        flops=6 * rows * samples,          # 3 reductions + center + scale
        transcendentals=rows,              # one reciprocal per row
        bytes_accessed=2 * rows * samples * itemsize,
    )

    out2 = pl.pallas_call(
        normalize_audio_kernel,
        out_shape=jax.ShapeDtypeStruct((rows, samples), x.dtype),
        in_specs=[pl.BlockSpec(memory_space=pltpu.MemorySpace.VMEM)],
        out_specs=pl.BlockSpec(memory_space=pltpu.MemorySpace.VMEM),
        cost_estimate=cost,
    )(x2)
    return out2.reshape(orig_shape)


# ---------------------------------------------------------------------------
# Main
# ---------------------------------------------------------------------------
if __name__ == "__main__":
    # Small audio-like shape: [batch, channels, samples]; normalize over samples.
    batch, channels, samples = 2, 4, 1024
    key = jax.random.PRNGKey(0)
    x = jax.random.normal(key, (batch, channels, samples), jnp.float32) * 3.0 + 0.5

    out = normalize_audio(x)
    out = jax.block_until_ready(out)

    # Pure-JAX reference (identical formula to the PyTorch module).
    val_range = (x.max(axis=-1, keepdims=True)
                 - x.min(axis=-1, keepdims=True) + EPS) / 2.0
    ref = (x - x.mean(axis=-1, keepdims=True)) / val_range

    assert out.shape == x.shape
    assert jnp.allclose(out, ref, atol=1e-5, rtol=1e-5), (
        float(jnp.max(jnp.abs(out - ref))))

    print("KERNEL_OK")
</pallas_src>

<mosaic_0001>
module attributes {stable_mosaic.version = 11 : i64} {
  func.func @normalize_audio_kernel(%arg0: memref<8x1024xf32, #tpu.memory_space<vmem>>, %arg1: memref<8x1024xf32, #tpu.memory_space<vmem>>) attributes {dimension_semantics = [], scalar_prefetch = 0 : i64, scratch_operands = 0 : i64, tpu.core_type = #tpu.core_type<tc>} {
    %c0 = arith.constant 0 : index
    %c0_0 = arith.constant 0 : index
    %0 = vector.load %arg0[%c0, %c0_0] : memref<8x1024xf32, #tpu.memory_space<vmem>>, vector<8x1024xf32>
    %cst = arith.constant dense<0xFF800000> : vector<8xf32>
    %1 = vector.multi_reduction <maximumf>, %0, %cst [1] : vector<8x1024xf32> to vector<8xf32>
    %2 = vector.shape_cast %1 : vector<8xf32> to vector<8x1xf32>
    %cst_1 = arith.constant dense<0x7F800000> : vector<8xf32>
    %3 = vector.multi_reduction <minimumf>, %0, %cst_1 [1] : vector<8x1024xf32> to vector<8xf32>
    %4 = vector.shape_cast %3 : vector<8xf32> to vector<8x1xf32>
    %cst_2 = arith.constant dense<0.000000e+00> : vector<8xf32>
    %5 = vector.multi_reduction <add>, %0, %cst_2 [1] : vector<8x1024xf32> to vector<8xf32>
    %6 = vector.shape_cast %5 : vector<8xf32> to vector<8x1xf32>
    %cst_3 = arith.constant 1.024000e+03 : f32
    %7 = vector.broadcast %cst_3 : f32 to vector<8x1xf32>
    %8 = arith.divf %6, %7 : vector<8x1xf32>
    %9 = arith.subf %2, %4 : vector<8x1xf32>
    %cst_4 = arith.constant 9.99999993E-9 : f32
    %10 = vector.broadcast %cst_4 : f32 to vector<8x1xf32>
    %11 = arith.addf %9, %10 : vector<8x1xf32>
    %cst_5 = arith.constant 5.000000e-01 : f32
    %12 = vector.broadcast %cst_5 : f32 to vector<8x1xf32>
    %13 = arith.mulf %11, %12 : vector<8x1xf32>
    %14 = vector.broadcast %8 : vector<8x1xf32> to vector<8x1024xf32>
    %15 = arith.subf %0, %14 : vector<8x1024xf32>
    %16 = vector.broadcast %13 : vector<8x1xf32> to vector<8x1024xf32>
    %17 = arith.divf %15, %16 : vector<8x1024xf32>
    %c0_6 = arith.constant 0 : index
    %c0_7 = arith.constant 0 : index
    %18 = vector.load %arg1[%c0_6, %c0_7] : memref<8x1024xf32, #tpu.memory_space<vmem>>, vector<8x1024xf32>
    tpu.vector_store %arg1[%c0_6, %c0_7], %17 {strides = array<i32>} : memref<8x1024xf32, #tpu.memory_space<vmem>>, vector<8x1024xf32>,
    return
  }
}

</mosaic_0001>

<llo_original>
// kernel: normalize_audio.1
$region0: #{normalize_audio.1}
  #allocation0 [shape = 'u32[]', space=smem, size = 0x4, offset = 0x4, fixed_abs, tag = 'smem constant byte address 0x4 - core index']
  #allocation1 [shape = 'u32[72,128]{1,0:T(1,128)}', space=vmem, size = 0x9000, scoped, tag = 'internal scratch']
  %s0 = inlined_call_operand.vmem [shape: f32[8,1024], index: 0, kind: input, shape index: {}]
  %s1 = inlined_call_operand.vmem [shape: f32[8,1024], index: 1, kind: output, shape index: {}]
  %s2 = sld [smem:[#allocation0]]
  $region14: #{normalize_audio.1} parent=0
    _
  %s4 = ssub.s32 1, %s2
  %s5 = scalar_select 0, %s4, %s2
  // Predicated region
  $region2: #{normalize_audio.1} parent=0 // pred_check
    _
  $region3: #{normalize_audio.1} parent=0 // pred_check_branch
    %7 = sbr.rel (0) target = $region5
  $region4: #{normalize_audio.1} parent=0 // pred_region
    _
  $region5: #{normalize_audio.1} parent=0 // pred_fallthru
    _
  %v8 = vld [vmem:[%s0] sm:$0xff]
  %v9 = vld [vmem:[%s0 + $0x8] sm:$0xff]
  %v10 = vld [vmem:[%s0 + $0x10] sm:$0xff]
  %v11 = vld [vmem:[%s0 + $0x18] sm:$0xff]
  %v12 = vld [vmem:[%s0 + $0x20] sm:$0xff]
  %v13 = vld [vmem:[%s0 + $0x28] sm:$0xff]
  %v14 = vld [vmem:[%s0 + $0x30] sm:$0xff]
  %v15 = vld [vmem:[%s0 + $0x38] sm:$0xff]
  %v16 = vmax.f32 %v8, %v12
  %v17 = vmax.f32 %v9, %v13
  %v18 = vmax.f32 %v10, %v14
  %v19 = vmax.f32 %v11, %v15
  %v20 = vmax.f32 %v16, %v17
  %v21 = vmax.f32 %v18, %v19
  %v22 = vmax.f32 %v20, %v21
  %23 = vmax.xlane.f32.xlu0 %v22
  %v24 = vpop.xlane.xlu0 %23
  %v25 = vmin.f32 %v8, %v12
  %v26 = vmin.f32 %v9, %v13
  %v27 = vmin.f32 %v10, %v14
  %v28 = vmin.f32 %v11, %v15
  %v29 = vmin.f32 %v25, %v26
  %v30 = vmin.f32 %v27, %v28
  %v31 = vmin.f32 %v29, %v30
  %32 = vmin.xlane.f32.xlu0 %v31
  %v33 = vpop.xlane.xlu0 %32
  %v34 = vadd.f32 %v8, %v9
  %v35 = vadd.f32 %v34, %v10
  %v36 = vadd.f32 %v35, %v11
  %v37 = vadd.f32 %v36, %v12
  %v38 = vadd.f32 %v37, %v13
  %v39 = vadd.f32 %v38, %v14
  %v40 = vadd.f32 %v39, %v15
  %41 = vadd.xlane.f32.xlu0 %v40
  %v42 = vpop.xlane.xlu0 %41
  %v43 = vrcp.pop 1024.0
  %v44 = vmul.f32 1024.0, %v43
  %v45 = vsub.f32 1.0, %v44
  %v46 = vmul.f32 %v43, %v45
  %v47 = vadd.f32 %v43, %v46
  %vm48 = vweird.f32 %v43
  %v49 = vsel %vm48, %v43, %v47
  %v50 = vmul.f32 %v42, %v49
  %v51 = vsub.f32 %v24, %v33
  %v52 = vadd.f32 %v51, 1e-08
  %v53 = vmul.f32 %v52, 0.5
  %v54 = vsub.f32 %v8, %v50
  %v55 = vsub.f32 %v9, %v50
  %v56 = vsub.f32 %v10, %v50
  %v57 = vsub.f32 %v11, %v50
  %v58 = vsub.f32 %v12, %v50
  %v59 = vsub.f32 %v13, %v50
  %v60 = vsub.f32 %v14, %v50
  %v61 = vsub.f32 %v15, %v50
  %v62 = vrcp.pop %v53
  %v63 = vmul.f32 %v53, %v62
  %v64 = vsub.f32 1.0, %v63
  %v65 = vmul.f32 %v62, %v64
  %v66 = vadd.f32 %v62, %v65
  %vm67 = vweird.f32 %v53
  %vm68 = vweird.f32 %v62
  %vm69 = vmor %vm67, %vm68
  %v70 = vsel %vm69, %v62, %v66
  %v71 = vand.u32 2147483647, %v53
  %vm72 = vcmp.eq.f32.partialorder %v71, 8.507059e+37
  %v73 = vand.u32 %v53, 2147483648
  %v74 = vor.u32 1.1754944e-38, %v73
  %v75 = vsel %vm72, %v74, %v70
  %v76 = vmul.f32 %v54, %v75
  %v77 = vmul.f32 %v55, %v75
  %v78 = vmul.f32 %v56, %v75
  %v79 = vmul.f32 %v57, %v75
  %v80 = vmul.f32 %v58, %v75
  %v81 = vmul.f32 %v59, %v75
  %v82 = vmul.f32 %v60, %v75
  %v83 = vmul.f32 %v61, %v75
  %84 = vst [vmem:[%s1] sm:$0xff] %v76
  %85 = vst [vmem:[%s1 + $0x8] sm:$0xff] %v77
  %86 = vst [vmem:[%s1 + $0x10] sm:$0xff] %v78
  %87 = vst [vmem:[%s1 + $0x18] sm:$0xff] %v79
  %88 = vst [vmem:[%s1 + $0x20] sm:$0xff] %v80
  %89 = vst [vmem:[%s1 + $0x28] sm:$0xff] %v81
  %90 = vst [vmem:[%s1 + $0x30] sm:$0xff] %v82
  %91 = vst [vmem:[%s1 + $0x38] sm:$0xff] %v83
  // Predicated region
  $region6: #{normalize_audio.1} parent=0 // pred_check
    _
  $region7: #{normalize_audio.1} parent=0 // pred_check_branch
    %93 = sbr.rel (0) target = $region9
  $region8: #{normalize_audio.1} parent=0 // pred_region
    _
  $region9: #{normalize_audio.1} parent=0 // pred_fallthru
    _
  // Predicated region
  $region10: #{normalize_audio.1} parent=0 // pred_check
    _
  $region11: #{normalize_audio.1} parent=0 // pred_check_branch
    %95 = sbr.rel (0) target = $region13
  $region12: #{normalize_audio.1} parent=0 // pred_region
    _
  $region13: #{normalize_audio.1} parent=0 // pred_fallthru
    _

</llo_original>
